<compile_context>
chip_gen: v5e
topology: v5e:2x2
jax: 0.10.0
libtpu: 0.0.40
codegen_flags: <defaults>
</compile_context>

<pallas_src>
import functools

import numpy as np

import jax
import jax.numpy as jnp
from jax.experimental import pallas as pl
from jax.experimental.pallas import tpu as pltpu


_NEG = np.float32(-1e30)


def _round_up(x, m):
    return ((x + m - 1) // m) * m


# ----------------------------------------------------------------------------
# Pallas kernel: fused im2col-conv + bias + ReLU + per-branch maxpool + linear
# ----------------------------------------------------------------------------
def _author_embedding_kernel(
    emb_ref,                 # (b_blk, W_k, E)       compute_dtype
    w_ref,                   # (k_max*E, C_pad)      compute_dtype (taps folded into K)
    b_ref,                   # (1, C_pad)            f32
    mask_ref,                # (l_rows, C_pad)       f32 additive pool mask (0 / -1e30)
    wl_ref,                  # (C_pad, LIN_pad)      compute_dtype (pad rows/cols zero)
    bl_ref,                  # (1, LIN_pad)          f32
    out_ref,                 # (b_blk, LIN_pad)      f32
    *, k_max, l_rows,
):
    b_blk, _, e_dim = emb_ref.shape
    c_pad = w_ref.shape[-1]

    emb = emb_ref[...]
    # im2col: k_max shifted slices concatenated along lanes -> K = k_max*E, then one
    # lane-dense matmul with M = b_blk * l_rows.
    patches = jnp.concatenate(
        [emb[:, dk:dk + l_rows, :] for dk in range(k_max)], axis=-1)
    patches = patches.reshape(b_blk * l_rows, k_max * e_dim)
    conv = jnp.dot(patches, w_ref[...], preferred_element_type=jnp.float32)
    conv = conv.reshape(b_blk, l_rows, c_pad)

    # bias + ReLU, then per-branch MaxPool1d(pool_k) as an additive-masked row-max.
    conv = jnp.maximum(conv + b_ref[...].reshape(1, 1, c_pad), 0.0)
    feat = jnp.max(conv + mask_ref[...][None, :, :], axis=1)        # (b_blk, C_pad)

    # final linear (padded weight rows/cols are zero -> padding contributes nothing)
    out_ref[...] = (
        jnp.dot(feat.astype(wl_ref.dtype), wl_ref[...],
                preferred_element_type=jnp.float32)
        + bl_ref[...]
    )


# ----------------------------------------------------------------------------
# Block choice: budget the FULL per-step VMEM footprint, not just the input block
# ----------------------------------------------------------------------------
def _choose_b_blk(B, per_row_bytes, *, budget_bytes=8 << 20, target_steps=4):
    cap = max(8, (budget_bytes // max(1, per_row_bytes)) // 8 * 8)
    if B <= 16:
        # tiny batch: one small sublane-aligned block
        return min(cap, _round_up(max(B, 1), 8))
    # large batch: keep several grid steps so BlockSpec pipelining overlaps DMA with
    # compute and the "parallel" axis can shard across v7x's two TensorCores.
    want = _round_up((B + target_steps - 1) // target_steps, 8)
    return max(8, min(cap, want))


def author_embedding_pallas(emb, fused):
    """emb: (B, rows_real, E) in compute dtype; returns (B, LIN) f32."""
    B, rows_real, E = emb.shape
    k_max, l_rows, W_k = fused["k_max"], fused["l_rows"], fused["W_k"]
    w2d, b2 = fused["w2d"], fused["b2"]
    mask, wl, bl = fused["pool_mask"], fused["wl_pad"], fused["bl_pad"]
    C_pad = w2d.shape[-1]
    LIN_pad = wl.shape[-1]
    cd_bytes = emb.dtype.itemsize

    # per-batch-row VMEM footprint: 2x input (double-buffered) + patches + f32 conv
    # accumulator + feat + 2x output block.
    per_row = (2 * W_k * E * cd_bytes
               + l_rows * k_max * E * cd_bytes
               + l_rows * C_pad * 4
               + C_pad * 4
               + 2 * LIN_pad * 4)
    fixed = ((k_max * E * C_pad + C_pad * LIN_pad) * cd_bytes
             + (C_pad + l_rows * C_pad + LIN_pad) * 4)

    b_blk = _choose_b_blk(B, per_row)
    B_pad = _round_up(B, b_blk)

    # pad batch to a multiple of b_blk and rows to W_k (zero rows are masked away).
    emb = jnp.pad(emb, ((0, B_pad - B), (0, W_k - rows_real), (0, 0)))

    vmem_est = per_row * b_blk + fixed
    vmem_limit = int(min(max(2 * vmem_est, 16 << 20), 48 << 20))

    kernel = functools.partial(_author_embedding_kernel, k_max=k_max, l_rows=l_rows)
    out = pl.pallas_call(
        kernel,
        out_shape=jax.ShapeDtypeStruct((B_pad, LIN_pad), jnp.float32),
        grid=(B_pad // b_blk,),
        in_specs=[
            pl.BlockSpec((b_blk, W_k, E), lambda i: (i, 0, 0)),
            pl.BlockSpec(w2d.shape, lambda i: (0, 0)),
            pl.BlockSpec(b2.shape, lambda i: (0, 0)),
            pl.BlockSpec(mask.shape, lambda i: (0, 0)),
            pl.BlockSpec(wl.shape, lambda i: (0, 0)),
            pl.BlockSpec(bl.shape, lambda i: (0, 0)),
        ],
        out_specs=pl.BlockSpec((b_blk, LIN_pad), lambda i: (i, 0)),
        compiler_params=pltpu.CompilerParams(
            dimension_semantics=("parallel",),
            vmem_limit_bytes=vmem_limit),
    )(emb, w2d, b2, mask, wl, bl)
    return out[:B, :fused["lin"]]


# ----------------------------------------------------------------------------
# Parameters (deterministic, matching the nn.Module __init__ shapes)
# ----------------------------------------------------------------------------
def init_params(key, vocab_size, embedding_dim, out_channels, kernel_sizes,
                linear_size):
    keys = jax.random.split(key, 9)
    p = {}
    p["embedding"] = jax.random.normal(
        keys[0], (vocab_size, embedding_dim), jnp.float32)
    for i, (C, k) in enumerate(zip(out_channels, kernel_sizes)):
        # PyTorch Conv2d weight layout: (out_ch, in_ch=1, kH=k, kW=E)
        p[f"conv_w{i + 1}"] = 0.1 * jax.random.normal(
            keys[1 + 2 * i], (C, 1, k, embedding_dim), jnp.float32)
        p[f"conv_b{i + 1}"] = 0.1 * jax.random.normal(
            keys[2 + 2 * i], (C,), jnp.float32)
    in_f = sum(out_channels)
    p["lin_w"] = 0.1 * jax.random.normal(keys[7], (linear_size, in_f), jnp.float32)
    p["lin_b"] = 0.1 * jax.random.normal(keys[8], (linear_size,), jnp.float32)
    return p


# ----------------------------------------------------------------------------
# Glue: fuse / pad the weights ONCE (plain JAX, outside the kernel)
# ----------------------------------------------------------------------------
def prepare_fused_params(params, *, window_size, out_channels, kernel_sizes,
                         compute_dtype=jnp.bfloat16):
    k_max = max(kernel_sizes)
    E = params["embedding"].shape[1]
    Csum = sum(out_channels)
    LIN = params["lin_w"].shape[0]
    C_pad = _round_up(Csum, 128)
    LIN_pad = _round_up(LIN, 128)

    # reproduces the module's odd use of out_channels in the pool kernel size
    pool_ks = tuple(window_size - c + 1 for c in out_channels)
    l_eff = max(pool_ks)
    for k, pk in zip(kernel_sizes, pool_ks):
        assert 1 <= pk <= window_size - k + 1, "MaxPool1d window longer than conv output"
    assert l_eff <= window_size - k_max + 1, (
        "zero-tap conv fusion requires max(pool_k) <= window - k_max + 1")

    l_rows = _round_up(l_eff, 8)              # conv rows computed (sublane-aligned)
    rows_real = l_eff + k_max - 1             # embedding rows that affect the output
    W_k = _round_up(l_rows + k_max - 1, 8)    # embedding rows fed to the kernel

    w_parts, b_parts, lim_parts = [], [], []
    for i, (C, k) in enumerate(zip(out_channels, kernel_sizes)):
        w = jnp.transpose(params[f"conv_w{i + 1}"][:, 0], (1, 2, 0))   # (k, E, C)
        w = jnp.pad(w, ((0, k_max - k), (0, 0), (0, 0)))               # zero extra taps
        w_parts.append(w)
        b_parts.append(params[f"conv_b{i + 1}"])
        lim_parts.append(np.full((C,), pool_ks[i], np.int32))

    w_fused = jnp.concatenate(w_parts, axis=2)                          # (k_max, E, Csum)
    w_fused = jnp.pad(w_fused, ((0, 0), (0, 0), (0, C_pad - Csum)))     # lane pad
    w2d = w_fused.reshape(k_max * E, C_pad).astype(compute_dtype)       # taps folded into K
    b2 = jnp.pad(jnp.concatenate(b_parts), (0, C_pad - Csum)).reshape(1, C_pad)
    b2 = b2.astype(jnp.float32)

    # additive pool mask: 0 where row < pool_k[col], else large-negative.
    limits = np.concatenate(lim_parts + [np.ones((C_pad - Csum,), np.int32)])
    rows = np.arange(l_rows, dtype=np.int32)[:, None]
    pool_mask = jnp.asarray(
        np.where(rows < limits[None, :], np.float32(0.0), _NEG).astype(np.float32))

    wl_pad = jnp.zeros((C_pad, LIN_pad), jnp.float32).at[:Csum, :LIN].set(
        params["lin_w"].T).astype(compute_dtype)
    bl_pad = jnp.pad(params["lin_b"], (0, LIN_pad - LIN)).reshape(1, LIN_pad)
    bl_pad = bl_pad.astype(jnp.float32)

    emb_table = params["embedding"].astype(compute_dtype)

    return dict(w2d=w2d, b2=b2, pool_mask=pool_mask, wl_pad=wl_pad, bl_pad=bl_pad,
                emb_table=emb_table, k_max=k_max, l_rows=l_rows, rows_real=rows_real,
                W_k=W_k, lin=LIN)


# ----------------------------------------------------------------------------
# Forward (mirrors CNND.forward / CNND.author_embedding)
# ----------------------------------------------------------------------------
def make_cnnd_forward(params, *, window_size, out_channels, kernel_sizes,
                      compute_dtype=jnp.bfloat16):
    # weight fusion/padding is call-invariant: do it once here, not per forward.
    fused = prepare_fused_params(
        params, window_size=window_size, out_channels=out_channels,
        kernel_sizes=kernel_sizes, compute_dtype=compute_dtype)
    rows_real = fused["rows_real"]

    def author_embedding(tokens):
        # embedding lookup (gather) stays in plain JAX, trimmed to the rows the
        # kernel reads and done in the narrow compute dtype.
        emb = jnp.take(fused["emb_table"], tokens[:, :rows_real], axis=0)
        return author_embedding_pallas(emb, fused)

    @jax.jit
    def forward(x):
        x1 = x[:, :window_size]
        a1 = author_embedding(x1)
        # forward uses x2 = x[:, :window_size] == x1, so the second embedding pass is
        # bit-identical to the first; reuse it instead of recomputing.
        a2 = a1
        dist = jnp.sqrt(jnp.sum((a1 - a2) ** 2))                         # plain JAX
        return dist, a1, a2

    return forward


# ----------------------------------------------------------------------------
# Pure-JAX f32 reference for the author embedding (correctness check)
# ----------------------------------------------------------------------------
def author_embedding_ref(params, tokens, *, window_size, out_channels,
                         kernel_sizes):
    emb = jnp.take(params["embedding"], tokens, axis=0)                  # (B, W, E)
    feats = []
    for i, (C, k) in enumerate(zip(out_channels, kernel_sizes)):
        w = params[f"conv_w{i + 1}"][:, 0]                               # (C, k, E)
        b = params[f"conv_b{i + 1}"]
        L = window_size - k + 1
        patches = jnp.stack([emb[:, dk:dk + L, :] for dk in range(k)], axis=2)
        conv = jnp.einsum("blke,cke->blc", patches, w) + b[None, None, :]
        conv = jnp.maximum(conv, 0.0)
        K = window_size - C + 1
        feats.append(jnp.max(conv[:, :K, :], axis=1))                    # (B, C)
    feat = jnp.concatenate(feats, axis=1)
    return feat @ params["lin_w"].T + params["lin_b"][None, :]


if __name__ == "__main__":
    # small, shape-consistent config
    VOCAB = 50
    WINDOW = 16
    EMB = 32
    OUT_CH = (8, 8, 8)
    K_SIZES = (3, 4, 5)
    LIN = 16
    B, SEQ = 2, 20

    key = jax.random.PRNGKey(0)
    k_par, k_x = jax.random.split(key)
    params = init_params(k_par, VOCAB, EMB, OUT_CH, K_SIZES, LIN)
    x = jax.random.randint(k_x, (B, SEQ), 0, VOCAB, dtype=jnp.int32)

    forward = make_cnnd_forward(
        params, window_size=WINDOW, out_channels=OUT_CH, kernel_sizes=K_SIZES,
        compute_dtype=jnp.bfloat16)
    dist, a1, a2 = forward(x)
    dist = jax.block_until_ready(dist)

    # check the Pallas author embedding against the pure-JAX f32 reference
    # (bf16 matmul path -> loosened tolerance)
    a_ref = author_embedding_ref(
        params, x[:, :WINDOW], window_size=WINDOW, out_channels=OUT_CH,
        kernel_sizes=K_SIZES)
    assert jnp.allclose(a1, a_ref, rtol=5e-2, atol=5e-2), "author_embedding mismatch"
    # x1 == x2 in the module's forward, so the distance is exactly 0
    assert jnp.isfinite(dist) and float(dist) < 1e-5, f"unexpected dist {dist}"

    print("KERNEL_OK")
</pallas_src>

<mosaic_0001>
module attributes {stable_mosaic.version = 11 : i64} {
  func.func @_author_embedding_kernel(%arg0: i32, %arg1: memref<8x24x32xbf16, #tpu.memory_space<vmem>>, %arg2: memref<160x128xbf16, #tpu.memory_space<vmem>>, %arg3: memref<1x128xf32, #tpu.memory_space<vmem>>, %arg4: memref<16x128xf32, #tpu.memory_space<vmem>>, %arg5: memref<128x128xbf16, #tpu.memory_space<vmem>>, %arg6: memref<1x128xf32, #tpu.memory_space<vmem>>, %arg7: memref<8x128xf32, #tpu.memory_space<vmem>>) attributes {dimension_semantics = [#tpu.dimension_semantics<parallel>], iteration_bounds = array<i64: 1>, scalar_prefetch = 0 : i64, scratch_operands = 0 : i64, tpu.core_type = #tpu.core_type<tc>, window_params = [{transform_indices = @transform_0, window_bounds = array<i64: 8, 24, 32>}, {pipeline_mode = #tpu.pipeline_mode<synchronous>, transform_indices = @transform_1, window_bounds = array<i64: 160, 128>}, {pipeline_mode = #tpu.pipeline_mode<synchronous>, transform_indices = @transform_2, window_bounds = array<i64: 1, 128>}, {pipeline_mode = #tpu.pipeline_mode<synchronous>, transform_indices = @transform_3, window_bounds = array<i64: 16, 128>}, {pipeline_mode = #tpu.pipeline_mode<synchronous>, transform_indices = @transform_4, window_bounds = array<i64: 128, 128>}, {pipeline_mode = #tpu.pipeline_mode<synchronous>, transform_indices = @transform_5, window_bounds = array<i64: 1, 128>}, {transform_indices = @transform_6, window_bounds = array<i64: 8, 128>}]} {
    %c0 = arith.constant 0 : index
    %c0_0 = arith.constant 0 : index
    %c0_1 = arith.constant 0 : index
    %0 = vector.load %arg1[%c0, %c0_0, %c0_1] : memref<8x24x32xbf16, #tpu.memory_space<vmem>>, vector<8x24x32xbf16>
    %1 = vector.extract_strided_slice %0 {offsets = [0, 0, 0], sizes = [8, 16, 32], strides = [1, 1, 1]} : vector<8x24x32xbf16> to vector<8x16x32xbf16>
    %2 = vector.extract_strided_slice %0 {offsets = [0, 1, 0], sizes = [8, 16, 32], strides = [1, 1, 1]} : vector<8x24x32xbf16> to vector<8x16x32xbf16>
    %3 = vector.extract_strided_slice %0 {offsets = [0, 2, 0], sizes = [8, 16, 32], strides = [1, 1, 1]} : vector<8x24x32xbf16> to vector<8x16x32xbf16>
    %4 = vector.extract_strided_slice %0 {offsets = [0, 3, 0], sizes = [8, 16, 32], strides = [1, 1, 1]} : vector<8x24x32xbf16> to vector<8x16x32xbf16>
    %5 = vector.extract_strided_slice %0 {offsets = [0, 4, 0], sizes = [8, 16, 32], strides = [1, 1, 1]} : vector<8x24x32xbf16> to vector<8x16x32xbf16>
    %6 = tpu.concatenate %1, %2, %3, %4, %5 in 2 : vector<8x16x32xbf16>, vector<8x16x32xbf16>, vector<8x16x32xbf16>, vector<8x16x32xbf16>, vector<8x16x32xbf16> -> vector<8x16x160xbf16>
    %7 = vector.shape_cast %6 : vector<8x16x160xbf16> to vector<128x160xbf16>
    %c0_2 = arith.constant 0 : index
    %c0_3 = arith.constant 0 : index
    %8 = vector.load %arg2[%c0_2, %c0_3] : memref<160x128xbf16, #tpu.memory_space<vmem>>, vector<160x128xbf16>
    %cst = arith.constant dense<0.000000e+00> : vector<128x128xf32>
    %9 = tpu.matmul %7, %8, %cst {dimension_numbers = #tpu.dot_dimension_numbers<[1], [0], [0], [1], [0, 0, 1, 1], [], []>} : vector<128x160xbf16>, vector<160x128xbf16>, vector<128x128xf32> -> vector<128x128xf32>
    %10 = vector.shape_cast %9 : vector<128x128xf32> to vector<8x16x128xf32>
    %c0_4 = arith.constant 0 : index
    %c0_5 = arith.constant 0 : index
    %11 = vector.load %arg3[%c0_4, %c0_5] : memref<1x128xf32, #tpu.memory_space<vmem>>, vector<1x128xf32>
    %12 = vector.shape_cast %11 : vector<1x128xf32> to vector<1x1x128xf32>
    %13 = vector.broadcast %12 : vector<1x1x128xf32> to vector<8x16x128xf32>
    %14 = arith.addf %10, %13 : vector<8x16x128xf32>
    %cst_6 = arith.constant 0.000000e+00 : f32
    %15 = vector.broadcast %cst_6 : f32 to vector<8x16x128xf32>
    %16 = arith.maximumf %14, %15 : vector<8x16x128xf32>
    %c0_7 = arith.constant 0 : index
    %c0_8 = arith.constant 0 : index
    %17 = vector.load %arg4[%c0_7, %c0_8] : memref<16x128xf32, #tpu.memory_space<vmem>>, vector<16x128xf32>
    %18 = vector.shape_cast %17 : vector<16x128xf32> to vector<1x16x128xf32>
    %19 = vector.broadcast %18 : vector<1x16x128xf32> to vector<8x16x128xf32>
    %20 = arith.addf %16, %19 : vector<8x16x128xf32>
    %cst_9 = arith.constant dense<0xFF800000> : vector<8x128xf32>
    %21 = vector.multi_reduction <maximumf>, %20, %cst_9 [1] : vector<8x16x128xf32> to vector<8x128xf32>
    %22 = arith.truncf %21 : vector<8x128xf32> to vector<8x128xbf16>
    %c0_10 = arith.constant 0 : index
    %c0_11 = arith.constant 0 : index
    %23 = vector.load %arg5[%c0_10, %c0_11] : memref<128x128xbf16, #tpu.memory_space<vmem>>, vector<128x128xbf16>
    %cst_12 = arith.constant dense<0.000000e+00> : vector<8x128xf32>
    %24 = tpu.matmul %22, %23, %cst_12 {dimension_numbers = #tpu.dot_dimension_numbers<[1], [0], [0], [1], [0, 0, 1, 1], [], []>} : vector<8x128xbf16>, vector<128x128xbf16>, vector<8x128xf32> -> vector<8x128xf32>
    %c0_13 = arith.constant 0 : index
    %c0_14 = arith.constant 0 : index
    %25 = vector.load %arg6[%c0_13, %c0_14] : memref<1x128xf32, #tpu.memory_space<vmem>>, vector<1x128xf32>
    %26 = vector.broadcast %25 : vector<1x128xf32> to vector<8x128xf32>
    %27 = arith.addf %24, %26 : vector<8x128xf32>
    %c0_15 = arith.constant 0 : index
    %c0_16 = arith.constant 0 : index
    %28 = vector.load %arg7[%c0_15, %c0_16] : memref<8x128xf32, #tpu.memory_space<vmem>>, vector<8x128xf32>
    tpu.vector_store %arg7[%c0_15, %c0_16], %27 {strides = array<i32>} : memref<8x128xf32, #tpu.memory_space<vmem>>, vector<8x128xf32>,
    return
  }
  func.func @transform_0(%arg0: i32) -> (i32, i32, i32) {
    %c0_i32 = arith.constant 0 : i32
    %c0_i32_0 = arith.constant 0 : i32
    %c0_i32_1 = arith.constant 0 : i32
    return %arg0, %c0_i32, %c0_i32_0 : i32, i32, i32
  }
  func.func @transform_1(%arg0: i32) -> (i32, i32) {
    %c0_i32 = arith.constant 0 : i32
    %c0_i32_0 = arith.constant 0 : i32
    %c0_i32_1 = arith.constant 0 : i32
    return %c0_i32, %c0_i32_0 : i32, i32
  }
  func.func @transform_2(%arg0: i32) -> (i32, i32) {
    %c0_i32 = arith.constant 0 : i32
    %c0_i32_0 = arith.constant 0 : i32
    %c0_i32_1 = arith.constant 0 : i32
    return %c0_i32, %c0_i32_0 : i32, i32
  }
  func.func @transform_3(%arg0: i32) -> (i32, i32) {
    %c0_i32 = arith.constant 0 : i32
    %c0_i32_0 = arith.constant 0 : i32
    %c0_i32_1 = arith.constant 0 : i32
    return %c0_i32, %c0_i32_0 : i32, i32
  }
  func.func @transform_4(%arg0: i32) -> (i32, i32) {
    %c0_i32 = arith.constant 0 : i32
    %c0_i32_0 = arith.constant 0 : i32
    %c0_i32_1 = arith.constant 0 : i32
    return %c0_i32, %c0_i32_0 : i32, i32
  }
  func.func @transform_5(%arg0: i32) -> (i32, i32) {
    %c0_i32 = arith.constant 0 : i32
    %c0_i32_0 = arith.constant 0 : i32
    %c0_i32_1 = arith.constant 0 : i32
    return %c0_i32, %c0_i32_0 : i32, i32
  }
  func.func @transform_6(%arg0: i32) -> (i32, i32) {
    %c0_i32 = arith.constant 0 : i32
    %c0_i32_0 = arith.constant 0 : i32
    return %arg0, %c0_i32 : i32, i32
  }
}

</mosaic_0001>

<llo_original>
// kernel: forward.1
$region0: #{forward.1}
  #allocation0 [shape = 'u32[]', space=smem, size = 0x4, offset = 0x4, fixed_abs, tag = 'smem constant byte address 0x4 - core index']
  #allocation1 [shape = 'u32[72,128]{1,0:T(1,128)}', space=vmem, size = 0x9000, scoped, tag = 'internal scratch']
  %s0 = inlined_call_operand.vmem [shape: bf16[8,24,32], index: 0, kind: input, shape index: {}]
  %s1 = inlined_call_operand.vmem [shape: bf16[160,128], index: 1, kind: input, shape index: {}]
  %s2 = inlined_call_operand.vmem [shape: f32[1,128], index: 2, kind: input, shape index: {}]
  %s3 = inlined_call_operand.vmem [shape: f32[16,128], index: 3, kind: input, shape index: {}]
  %s4 = inlined_call_operand.vmem [shape: bf16[128,128], index: 4, kind: input, shape index: {}]
  %s5 = inlined_call_operand.vmem [shape: f32[1,128], index: 5, kind: input, shape index: {}]
  %s6 = inlined_call_operand.vmem [shape: f32[8,128], index: 6, kind: output, shape index: {}]
  %s7 = sld [smem:[#allocation0]]
  $region34: #{forward.1} parent=0
    _
  %s9 = ssub.s32 1, %s7
  %s10 = scalar_select 0, %s9, %s7
  // Predicated region
  $region2: #{forward.1} parent=0 // pred_check
    _
  $region3: #{forward.1} parent=0 // pred_check_branch
    %12 = sbr.rel (0) target = $region5
  $region4: #{forward.1} parent=0 // pred_region
    _
  $region5: #{forward.1} parent=0 // pred_fallthru
    _
  // Predicated region
  $region6: #{forward.1} parent=0 // pred_check
    _
  $region7: #{forward.1} parent=0 // pred_check_branch
    %14 = sbr.rel (0) target = $region9
  $region8: #{forward.1} parent=0 // pred_region
    _
  $region9: #{forward.1} parent=0 // pred_fallthru
    _
  // Predicated region
  $region10: #{forward.1} parent=0 // pred_check
    _
  $region11: #{forward.1} parent=0 // pred_check_branch
    %16 = sbr.rel (0) target = $region13
  $region12: #{forward.1} parent=0 // pred_region
    _
  $region13: #{forward.1} parent=0 // pred_fallthru
    _
  // Predicated region
  $region14: #{forward.1} parent=0 // pred_check
    _
  $region15: #{forward.1} parent=0 // pred_check_branch
    %18 = sbr.rel (0) target = $region17
  $region16: #{forward.1} parent=0 // pred_region
    _
  $region17: #{forward.1} parent=0 // pred_fallthru
    _
  // Predicated region
  $region18: #{forward.1} parent=0 // pred_check
    _
  $region19: #{forward.1} parent=0 // pred_check_branch
    %20 = sbr.rel (0) target = $region21
  $region20: #{forward.1} parent=0 // pred_region
    _
  $region21: #{forward.1} parent=0 // pred_fallthru
    _
  // Predicated region
  $region22: #{forward.1} parent=0 // pred_check
    _
  $region23: #{forward.1} parent=0 // pred_check_branch
    %22 = sbr.rel (0) target = $region25
  $region24: #{forward.1} parent=0 // pred_region
    _
  $region25: #{forward.1} parent=0 // pred_fallthru
    _
  %v24 = vld [vmem:[%s0] sm:$0xf]
  %v25 = vld [vmem:[%s0 + $0x4] sm:$0xf]
  %v26 = vld [vmem:[%s0 + $0x8] sm:$0xf]
  %v27 = vld [vmem:[%s0 + $0xc] sm:$0xf]
  %v28 = vld [vmem:[%s0 + $0x10] sm:$0xf]
  %v29 = vld [vmem:[%s0 + $0x14] sm:$0xf]
  %v30 = vld [vmem:[%s0 + $0x18] sm:$0xf]
  %v31 = vld [vmem:[%s0 + $0x1c] sm:$0xf]
  %v32 = vld [vmem:[%s0 + $0x20] sm:$0xf]
  %v33 = vld [vmem:[%s0 + $0x24] sm:$0xf]
  %v34 = vld [vmem:[%s0 + $0x28] sm:$0xf]
  %v35 = vld [vmem:[%s0 + $0x2c] sm:$0xf]
  %v36 = vld [vmem:[%s0 + $0x30] sm:$0xf]
  %v37 = vld [vmem:[%s0 + $0x34] sm:$0xf]
  %v38 = vld [vmem:[%s0 + $0x38] sm:$0xf]
  %v39 = vld [vmem:[%s0 + $0x3c] sm:$0xf]
  %v40 = vld [vmem:[%s0 + $0x40] sm:$0xf]
  %v41 = vld [vmem:[%s0 + $0x44] sm:$0xf]
  %v42 = vld [vmem:[%s0 + $0x48] sm:$0xf]
  %v43 = vld [vmem:[%s0 + $0x4c] sm:$0xf]
  %v44 = vld [vmem:[%s0 + $0x50] sm:$0xf]
  %v45 = vld [vmem:[%s0 + $0x54] sm:$0xf]
  %v46 = vld [vmem:[%s0 + $0x58] sm:$0xf]
  %v47 = vld [vmem:[%s0 + $0x5c] sm:$0xf]
  %v64 = vunpack.c.l.b16 %v24
  %v65 = vunpack.c.l.b16 %v25
  %v66 = vunpack.c.l.b16 %v27
  %v67 = vunpack.c.l.b16 %v28
  %v68 = vunpack.c.l.b16 %v30
  %v69 = vunpack.c.l.b16 %v31
  %v70 = vunpack.c.l.b16 %v33
  %v71 = vunpack.c.l.b16 %v34
  %v72 = vunpack.c.l.b16 %v36
  %v73 = vunpack.c.l.b16 %v37
  %v74 = vunpack.c.l.b16 %v39
  %v75 = vunpack.c.l.b16 %v40
  %v76 = vunpack.c.l.b16 %v42
  %v77 = vunpack.c.l.b16 %v43
  %v78 = vunpack.c.l.b16 %v45
  %v79 = vunpack.c.l.b16 %v46
  %v80 = vpack.c.b16 %v65, %v64
  %v81 = vpack.c.b16 %v67, %v66
  %v82 = vpack.c.b16 %v69, %v68
  %v83 = vpack.c.b16 %v71, %v70
  %v84 = vpack.c.b16 %v73, %v72
  %v85 = vpack.c.b16 %v75, %v74
  %v86 = vpack.c.b16 %v77, %v76
  %v87 = vpack.c.b16 %v79, %v78
  %v96 = vunpack.c.l.b16 %v26
  %v97 = vunpack.c.l.b16 %v29
  %v98 = vunpack.c.l.b16 %v32
  %v99 = vunpack.c.l.b16 %v35
  %v100 = vunpack.c.l.b16 %v38
  %v101 = vunpack.c.l.b16 %v41
  %v102 = vunpack.c.l.b16 %v44
  %v103 = vunpack.c.l.b16 %v47
  %v104 = vpack.c.b16 %v96, %v96
  %v105 = vpack.c.b16 %v97, %v97
  %v106 = vpack.c.b16 %v98, %v98
  %v107 = vpack.c.b16 %v99, %v99
  %v108 = vpack.c.b16 %v100, %v100
  %v109 = vpack.c.b16 %v101, %v101
  %v110 = vpack.c.b16 %v102, %v102
  %v111 = vpack.c.b16 %v103, %v103
  %vm112 = vsmask.f32 7424
  %v114 = vshrl.u32 %v80, 16
  %v116 = vshll.u32 %v80, 16
  %v118 = vrot.slane %v116, 1
  %v119 = vor.u32 %v114, %v118
  %v121 = vshll.u32 %v104, 16
  %v123 = vrot.slane %v121, 1
  %v124 = vsel %vm112, %v119, %v123
  %v126 = vshrl.u32 %v81, 16
  %v128 = vshll.u32 %v81, 16
  %v130 = vrot.slane %v128, 1
  %v131 = vor.u32 %v126, %v130
  %v133 = vshll.u32 %v105, 16
  %v135 = vrot.slane %v133, 1
  %v136 = vsel %vm112, %v131, %v135
  %v138 = vshrl.u32 %v82, 16
  %v140 = vshll.u32 %v82, 16
  %v142 = vrot.slane %v140, 1
  %v143 = vor.u32 %v138, %v142
  %v145 = vshll.u32 %v106, 16
  %v147 = vrot.slane %v145, 1
  %v148 = vsel %vm112, %v143, %v147
  %v150 = vshrl.u32 %v83, 16
  %v152 = vshll.u32 %v83, 16
  %v154 = vrot.slane %v152, 1
  %v155 = vor.u32 %v150, %v154
  %v157 = vshll.u32 %v107, 16
  %v159 = vrot.slane %v157, 1
  %v160 = vsel %vm112, %v155, %v159
  %v162 = vshrl.u32 %v84, 16
  %v164 = vshll.u32 %v84, 16
  %v166 = vrot.slane %v164, 1
  %v167 = vor.u32 %v162, %v166
  %v169 = vshll.u32 %v108, 16
  %v171 = vrot.slane %v169, 1
  %v172 = vsel %vm112, %v167, %v171
  %v174 = vshrl.u32 %v85, 16
  %v176 = vshll.u32 %v85, 16
  %v178 = vrot.slane %v176, 1
  %v179 = vor.u32 %v174, %v178
  %v181 = vshll.u32 %v109, 16
  %v183 = vrot.slane %v181, 1
  %v184 = vsel %vm112, %v179, %v183
  %v186 = vshrl.u32 %v86, 16
  %v188 = vshll.u32 %v86, 16
  %v190 = vrot.slane %v188, 1
  %v191 = vor.u32 %v186, %v190
  %v193 = vshll.u32 %v110, 16
  %v195 = vrot.slane %v193, 1
  %v196 = vsel %vm112, %v191, %v195
  %v198 = vshrl.u32 %v87, 16
  %v200 = vshll.u32 %v87, 16
  %v202 = vrot.slane %v200, 1
  %v203 = vor.u32 %v198, %v202
  %v205 = vshll.u32 %v111, 16
  %v207 = vrot.slane %v205, 1
  %v208 = vsel %vm112, %v203, %v207
  %209 = vrot.lane.b32.xlu0 %v124, 32
  %v210 = vpop.permute.xlu0 %209
  %211 = vrot.lane.b32.xlu0 %v136, 32
  %v212 = vpop.permute.xlu0 %211
  %213 = vrot.lane.b32.xlu0 %v148, 32
  %v214 = vpop.permute.xlu0 %213
  %215 = vrot.lane.b32.xlu0 %v160, 32
  %v216 = vpop.permute.xlu0 %215
  %217 = vrot.lane.b32.xlu0 %v172, 32
  %v218 = vpop.permute.xlu0 %217
  %219 = vrot.lane.b32.xlu0 %v184, 32
  %v220 = vpop.permute.xlu0 %219
  %221 = vrot.lane.b32.xlu0 %v196, 32
  %v222 = vpop.permute.xlu0 %221
  %223 = vrot.lane.b32.xlu0 %v208, 32
  %v224 = vpop.permute.xlu0 %223
  %vm225 = vcmask 1046528
  %v226 = vrot.slane %v80, 1
  %v227 = vrot.slane %v104, 1
  %v228 = vsel %vm225, %v226, %v227
  %v229 = vrot.slane %v81, 1
  %v230 = vrot.slane %v105, 1
  %v231 = vsel %vm225, %v229, %v230
  %v232 = vrot.slane %v82, 1
  %v233 = vrot.slane %v106, 1
  %v234 = vsel %vm225, %v232, %v233
  %v235 = vrot.slane %v83, 1
  %v236 = vrot.slane %v107, 1
  %v237 = vsel %vm225, %v235, %v236
  %v238 = vrot.slane %v84, 1
  %v239 = vrot.slane %v108, 1
  %v240 = vsel %vm225, %v238, %v239
  %v241 = vrot.slane %v85, 1
  %v242 = vrot.slane %v109, 1
  %v243 = vsel %vm225, %v241, %v242
  %v244 = vrot.slane %v86, 1
  %v245 = vrot.slane %v110, 1
  %v246 = vsel %vm225, %v244, %v245
  %v247 = vrot.slane %v87, 1
  %v248 = vrot.slane %v111, 1
  %v249 = vsel %vm225, %v247, %v248
  %250 = vrot.lane.b32.xlu0 %v228, 64
  %v251 = vpop.permute.xlu0 %250
  %252 = vrot.lane.b32.xlu0 %v231, 64
  %v253 = vpop.permute.xlu0 %252
  %254 = vrot.lane.b32.xlu0 %v234, 64
  %v255 = vpop.permute.xlu0 %254
  %256 = vrot.lane.b32.xlu0 %v237, 64
  %v257 = vpop.permute.xlu0 %256
  %258 = vrot.lane.b32.xlu0 %v240, 64
  %v259 = vpop.permute.xlu0 %258
  %260 = vrot.lane.b32.xlu0 %v243, 64
  %v261 = vpop.permute.xlu0 %260
  %262 = vrot.lane.b32.xlu0 %v246, 64
  %v263 = vpop.permute.xlu0 %262
  %264 = vrot.lane.b32.xlu0 %v249, 64
  %v265 = vpop.permute.xlu0 %264
  %vm266 = vsmask.f32 6400
  %v267 = vrot.slane %v114, 1
  %v268 = vrot.slane %v116, 2
  %v269 = vor.u32 %v267, %v268
  %v270 = vshrl.u32 %v104, 16
  %v272 = vrot.slane %v270, 1
  %v273 = vrot.slane %v121, 2
  %v274 = vor.u32 %v272, %v273
  %v275 = vsel %vm266, %v269, %v274
  %v276 = vrot.slane %v126, 1
  %v277 = vrot.slane %v128, 2
  %v278 = vor.u32 %v276, %v277
  %v279 = vshrl.u32 %v105, 16
  %v281 = vrot.slane %v279, 1
  %v282 = vrot.slane %v133, 2
  %v283 = vor.u32 %v281, %v282
  %v284 = vsel %vm266, %v278, %v283
  %v285 = vrot.slane %v138, 1
  %v286 = vrot.slane %v140, 2
  %v287 = vor.u32 %v285, %v286
  %v288 = vshrl.u32 %v106, 16
  %v290 = vrot.slane %v288, 1
  %v291 = vrot.slane %v145, 2
  %v292 = vor.u32 %v290, %v291
  %v293 = vsel %vm266, %v287, %v292
  %v294 = vrot.slane %v150, 1
  %v295 = vrot.slane %v152, 2
  %v296 = vor.u32 %v294, %v295
  %v297 = vshrl.u32 %v107, 16
  %v299 = vrot.slane %v297, 1
  %v300 = vrot.slane %v157, 2
  %v301 = vor.u32 %v299, %v300
  %v302 = vsel %vm266, %v296, %v301
  %v303 = vrot.slane %v162, 1
  %v304 = vrot.slane %v164, 2
  %v305 = vor.u32 %v303, %v304
  %v306 = vshrl.u32 %v108, 16
  %v308 = vrot.slane %v306, 1
  %v309 = vrot.slane %v169, 2
  %v310 = vor.u32 %v308, %v309
  %v311 = vsel %vm266, %v305, %v310
  %v312 = vrot.slane %v174, 1
  %v313 = vrot.slane %v176, 2
  %v314 = vor.u32 %v312, %v313
  %v315 = vshrl.u32 %v109, 16
  %v317 = vrot.slane %v315, 1
  %v318 = vrot.slane %v181, 2
  %v319 = vor.u32 %v317, %v318
  %v320 = vsel %vm266, %v314, %v319
  %v321 = vrot.slane %v186, 1
  %v322 = vrot.slane %v188, 2
  %v323 = vor.u32 %v321, %v322
  %v324 = vshrl.u32 %v110, 16
  %v326 = vrot.slane %v324, 1
  %v327 = vrot.slane %v193, 2
  %v328 = vor.u32 %v326, %v327
  %v329 = vsel %vm266, %v323, %v328
  %v330 = vrot.slane %v198, 1
  %v331 = vrot.slane %v200, 2
  %v332 = vor.u32 %v330, %v331
  %v333 = vshrl.u32 %v111, 16
  %v335 = vrot.slane %v333, 1
  %v336 = vrot.slane %v205, 2
  %v337 = vor.u32 %v335, %v336
  %v338 = vsel %vm266, %v332, %v337
  %339 = vrot.lane.b32.xlu0 %v275, 96
  %v340 = vpop.permute.xlu0 %339
  %341 = vrot.lane.b32.xlu0 %v284, 96
  %v342 = vpop.permute.xlu0 %341
  %343 = vrot.lane.b32.xlu0 %v293, 96
  %v344 = vpop.permute.xlu0 %343
  %345 = vrot.lane.b32.xlu0 %v302, 96
  %v346 = vpop.permute.xlu0 %345
  %347 = vrot.lane.b32.xlu0 %v311, 96
  %v348 = vpop.permute.xlu0 %347
  %349 = vrot.lane.b32.xlu0 %v320, 96
  %v350 = vpop.permute.xlu0 %349
  %351 = vrot.lane.b32.xlu0 %v329, 96
  %v352 = vpop.permute.xlu0 %351
  %353 = vrot.lane.b32.xlu0 %v338, 96
  %v354 = vpop.permute.xlu0 %353
  %vm355 = vcmask 1045504
  %v356 = vrot.slane %v80, 2
  %v357 = vrot.slane %v104, 2
  %v358 = vsel %vm355, %v356, %v357
  %v359 = vrot.slane %v81, 2
  %v360 = vrot.slane %v105, 2
  %v361 = vsel %vm355, %v359, %v360
  %v362 = vrot.slane %v82, 2
  %v363 = vrot.slane %v106, 2
  %v364 = vsel %vm355, %v362, %v363
  %v365 = vrot.slane %v83, 2
  %v366 = vrot.slane %v107, 2
  %v367 = vsel %vm355, %v365, %v366
  %v368 = vrot.slane %v84, 2
  %v369 = vrot.slane %v108, 2
  %v370 = vsel %vm355, %v368, %v369
  %v371 = vrot.slane %v85, 2
  %v372 = vrot.slane %v109, 2
  %v373 = vsel %vm355, %v371, %v372
  %v374 = vrot.slane %v86, 2
  %v375 = vrot.slane %v110, 2
  %v376 = vsel %vm355, %v374, %v375
  %v377 = vrot.slane %v87, 2
  %v378 = vrot.slane %v111, 2
  %v379 = vsel %vm355, %v377, %v378
  %vm380 = vcmask 261120
  %v382 = vsel %vm380, %v80, %v210
  %v384 = vsel %vm380, %v81, %v212
  %v386 = vsel %vm380, %v82, %v214
  %v388 = vsel %vm380, %v83, %v216
  %v390 = vsel %vm380, %v84, %v218
  %v392 = vsel %vm380, %v85, %v220
  %v394 = vsel %vm380, %v86, %v222
  %v396 = vsel %vm380, %v87, %v224
  %vm397 = vcmask 523264
  %v399 = vsel %vm397, %v382, %v251
  %v401 = vsel %vm397, %v384, %v253
  %v403 = vsel %vm397, %v386, %v255
  %v405 = vsel %vm397, %v388, %v257
  %v407 = vsel %vm397, %v390, %v259
  %v409 = vsel %vm397, %v392, %v261
  %v411 = vsel %vm397, %v394, %v263
  %v413 = vsel %vm397, %v396, %v265
  %vm414 = vcmask 785408
  %v416 = vsel %vm414, %v399, %v340
  %v419 = vsel %vm414, %v401, %v342
  %v422 = vsel %vm414, %v403, %v344
  %v425 = vsel %vm414, %v405, %v346
  %v428 = vsel %vm414, %v407, %v348
  %v431 = vsel %vm414, %v409, %v350
  %v434 = vsel %vm414, %v411, %v352
  %v437 = vsel %vm414, %v413, %v354
  %v439 = vld [vmem:[%s1] sm:$0xf]
  %v440 = vld [vmem:[%s1 + $0x4] sm:$0xf]
  %v441 = vld [vmem:[%s1 + $0x8] sm:$0xf]
  %v442 = vld [vmem:[%s1 + $0xc] sm:$0xf]
  %v443 = vld [vmem:[%s1 + $0x10] sm:$0xf]
  %v444 = vld [vmem:[%s1 + $0x14] sm:$0xf]
  %v445 = vld [vmem:[%s1 + $0x18] sm:$0xf]
  %v446 = vld [vmem:[%s1 + $0x1c] sm:$0xf]
  %v447 = vld [vmem:[%s1 + $0x20] sm:$0xf]
  %v448 = vld [vmem:[%s1 + $0x24] sm:$0xf]
  %v449 = vld [vmem:[%s1 + $0x28] sm:$0xf]
  %v450 = vld [vmem:[%s1 + $0x2c] sm:$0xf]
  %v451 = vld [vmem:[%s1 + $0x30] sm:$0xf]
  %v452 = vld [vmem:[%s1 + $0x34] sm:$0xf]
  %v453 = vld [vmem:[%s1 + $0x38] sm:$0xf]
  %v454 = vld [vmem:[%s1 + $0x3c] sm:$0xf]
  %v455 = vld [vmem:[%s1 + $0x40] sm:$0xf]
  %v456 = vld [vmem:[%s1 + $0x44] sm:$0xf]
  %v457 = vld [vmem:[%s1 + $0x48] sm:$0xf]
  %v458 = vld [vmem:[%s1 + $0x4c] sm:$0xf]
  %v479 = vunpack.c.l.b16 %v439
  %v480 = vunpack.c.l.b16 %v440
  %v481 = vunpack.c.l.b16 %v441
  %v482 = vunpack.c.l.b16 %v442
  %v483 = vunpack.c.l.b16 %v443
  %v484 = vunpack.c.l.b16 %v444
  %v485 = vunpack.c.l.b16 %v445
  %v486 = vunpack.c.l.b16 %v446
  %v487 = vunpack.c.l.b16 %v447
  %v488 = vunpack.c.l.b16 %v448
  %v489 = vunpack.c.l.b16 %v449
  %v490 = vunpack.c.l.b16 %v450
  %v491 = vunpack.c.l.b16 %v451
  %v492 = vunpack.c.l.b16 %v452
  %v493 = vunpack.c.l.b16 %v453
  %v494 = vunpack.c.l.b16 %v454
  %v495 = vunpack.c.l.b16 %v455
  %v496 = vunpack.c.l.b16 %v456
  %v497 = vunpack.c.l.b16 %v457
  %v498 = vunpack.c.l.b16 %v458
  %v499 = vpack.c.b16 %v480, %v479
  %v500 = vpack.c.b16 %v482, %v481
  %v501 = vpack.c.b16 %v484, %v483
  %v502 = vpack.c.b16 %v486, %v485
  %v503 = vpack.c.b16 %v488, %v487
  %v504 = vpack.c.b16 %v490, %v489
  %v505 = vpack.c.b16 %v492, %v491
  %v506 = vpack.c.b16 %v494, %v493
  %v507 = vpack.c.b16 %v496, %v495
  %v508 = vpack.c.b16 %v498, %v497
  %v520 = vsel %vm380, %v358, 0
  %v523 = vsel %vm380, %v361, 0
  %v526 = vsel %vm380, %v364, 0
  %v529 = vsel %vm380, %v367, 0
  %v532 = vsel %vm380, %v370, 0
  %v535 = vsel %vm380, %v373, 0
  %v538 = vsel %vm380, %v376, 0
  %v541 = vsel %vm380, %v379, 0
  %543 = vmatpush.bf16.msra.mxu0 %v506
  %544 = vmatpush.bf16.msra.mxu0 %v505
  %545 = vmatpush.bf16.msra.mxu0 %v504
  %546 = vmatpush.bf16.msra.mxu0 %v503
  %547 = vmatpush.bf16.msra.mxu0 %v502
  %548 = vmatpush.bf16.msra.mxu0 %v501
  %549 = vmatpush.bf16.msra.mxu0 %v500
  %550 = vmatpush.bf16.msra.mxu0 %v499
  %551 = vmatmul.bf16.gmra.mxu0 %v416
  %v552 = vpop.f32.mrf.mxu0
  %v553 = vadd.f32 0.0, %v552
  %v554 = vpop.f32.mrf.mxu0
  %v555 = vadd.f32 0.0, %v554
  %556 = vmatmul.bf16.gmra.mxu0 %v419
  %v557 = vpop.f32.mrf.mxu0
  %v558 = vadd.f32 0.0, %v557
  %v559 = vpop.f32.mrf.mxu0
  %v560 = vadd.f32 0.0, %v559
  %561 = vmatmul.bf16.gmra.mxu0 %v422
  %v562 = vpop.f32.mrf.mxu0
  %v563 = vadd.f32 0.0, %v562
  %v564 = vpop.f32.mrf.mxu0
  %v565 = vadd.f32 0.0, %v564
  %566 = vmatmul.bf16.gmra.mxu0 %v425
  %v567 = vpop.f32.mrf.mxu0
  %v568 = vadd.f32 0.0, %v567
  %v569 = vpop.f32.mrf.mxu0
  %v570 = vadd.f32 0.0, %v569
  %571 = vmatmul.bf16.gmra.mxu0 %v428
  %v572 = vpop.f32.mrf.mxu0
  %v573 = vadd.f32 0.0, %v572
  %v574 = vpop.f32.mrf.mxu0
  %v575 = vadd.f32 0.0, %v574
  %576 = vmatmul.bf16.gmra.mxu0 %v431
  %v577 = vpop.f32.mrf.mxu0
  %v578 = vadd.f32 0.0, %v577
  %v579 = vpop.f32.mrf.mxu0
  %v580 = vadd.f32 0.0, %v579
  %581 = vmatmul.bf16.gmra.mxu0 %v434
  %v582 = vpop.f32.mrf.mxu0
  %v583 = vadd.f32 0.0, %v582
  %v584 = vpop.f32.mrf.mxu0
  %v585 = vadd.f32 0.0, %v584
  %586 = vmatmul.bf16.gmra.mxu0 %v437
  %v587 = vpop.f32.mrf.mxu0
  %v588 = vadd.f32 0.0, %v587
  %v589 = vpop.f32.mrf.mxu0
  %v590 = vadd.f32 0.0, %v589
  %591 = vdwg.mxu0
  %592 = vmatpush.bf16.msra.mxu0 0
  %593 = vmatpush.bf16.msra.mxu0 0
  %594 = vmatpush.bf16.msra.mxu0 0
  %595 = vmatpush.bf16.msra.mxu0 0
  %596 = vmatpush.bf16.msra.mxu0 0
  %597 = vmatpush.bf16.msra.mxu0 0
  %598 = vmatpush.bf16.msra.mxu0 %v508
  %599 = vmatpush.bf16.msra.mxu0 %v507
  %600 = vmatmul.bf16.gmra.mxu0 %v520
  %v601 = vpop.f32.mrf.mxu0
  %v602 = vadd.f32 %v553, %v601
  %v603 = vpop.f32.mrf.mxu0
  %v604 = vadd.f32 %v555, %v603
  %605 = vmatmul.bf16.gmra.mxu0 %v523
  %v606 = vpop.f32.mrf.mxu0
  %v607 = vadd.f32 %v558, %v606
  %v608 = vpop.f32.mrf.mxu0
  %v609 = vadd.f32 %v560, %v608
  %610 = vmatmul.bf16.gmra.mxu0 %v526
  %v611 = vpop.f32.mrf.mxu0
  %v612 = vadd.f32 %v563, %v611
  %v613 = vpop.f32.mrf.mxu0
  %v614 = vadd.f32 %v565, %v613
  %615 = vmatmul.bf16.gmra.mxu0 %v529
  %v616 = vpop.f32.mrf.mxu0
  %v617 = vadd.f32 %v568, %v616
  %v618 = vpop.f32.mrf.mxu0
  %v619 = vadd.f32 %v570, %v618
  %620 = vmatmul.bf16.gmra.mxu0 %v532
  %v621 = vpop.f32.mrf.mxu0
  %v622 = vadd.f32 %v573, %v621
  %v623 = vpop.f32.mrf.mxu0
  %v624 = vadd.f32 %v575, %v623
  %625 = vmatmul.bf16.gmra.mxu0 %v535
  %v626 = vpop.f32.mrf.mxu0
  %v627 = vadd.f32 %v578, %v626
  %v628 = vpop.f32.mrf.mxu0
  %v629 = vadd.f32 %v580, %v628
  %630 = vmatmul.bf16.gmra.mxu0 %v538
  %v631 = vpop.f32.mrf.mxu0
  %v632 = vadd.f32 %v583, %v631
  %v633 = vpop.f32.mrf.mxu0
  %v634 = vadd.f32 %v585, %v633
  %635 = vmatmul.bf16.gmra.mxu0 %v541
  %v636 = vpop.f32.mrf.mxu0
  %v637 = vadd.f32 %v588, %v636
  %v638 = vpop.f32.mrf.mxu0
  %v639 = vadd.f32 %v590, %v638
  %640 = vdwg.mxu0
  %v641 = vld [vmem:[%s2] sm:$0x1]
  %v643 = vperm.slane %v641, 0
  %v645 = vadd.f32 %v602, %v643
  %v646 = vadd.f32 %v604, %v643
  %v647 = vadd.f32 %v607, %v643
  %v648 = vadd.f32 %v609, %v643
  %v649 = vadd.f32 %v612, %v643
  %v650 = vadd.f32 %v614, %v643
  %v651 = vadd.f32 %v617, %v643
  %v652 = vadd.f32 %v619, %v643
  %v653 = vadd.f32 %v622, %v643
  %v654 = vadd.f32 %v624, %v643
  %v655 = vadd.f32 %v627, %v643
  %v656 = vadd.f32 %v629, %v643
  %v657 = vadd.f32 %v632, %v643
  %v658 = vadd.f32 %v634, %v643
  %v659 = vadd.f32 %v637, %v643
  %v660 = vadd.f32 %v639, %v643
  %v661 = vmax.f32 %v645, 0.0
  %v662 = vmax.f32 %v646, 0.0
  %v663 = vmax.f32 %v647, 0.0
  %v664 = vmax.f32 %v648, 0.0
  %v665 = vmax.f32 %v649, 0.0
  %v666 = vmax.f32 %v650, 0.0
  %v667 = vmax.f32 %v651, 0.0
  %v668 = vmax.f32 %v652, 0.0
  %v669 = vmax.f32 %v653, 0.0
  %v670 = vmax.f32 %v654, 0.0
  %v671 = vmax.f32 %v655, 0.0
  %v672 = vmax.f32 %v656, 0.0
  %v673 = vmax.f32 %v657, 0.0
  %v674 = vmax.f32 %v658, 0.0
  %v675 = vmax.f32 %v659, 0.0
  %v676 = vmax.f32 %v660, 0.0
  %v677 = vld [vmem:[%s3] sm:$0xff]
  %v678 = vld [vmem:[%s3 + $0x8] sm:$0xff]
  %v679 = vadd.f32 %v661, %v677
  %v680 = vadd.f32 %v662, %v678
  %v681 = vadd.f32 %v663, %v677
  %v682 = vadd.f32 %v664, %v678
  %v683 = vadd.f32 %v665, %v677
  %v684 = vadd.f32 %v666, %v678
  %v685 = vadd.f32 %v667, %v677
  %v686 = vadd.f32 %v668, %v678
  %v687 = vadd.f32 %v669, %v677
  %v688 = vadd.f32 %v670, %v678
  %v689 = vadd.f32 %v671, %v677
  %v690 = vadd.f32 %v672, %v678
  %v691 = vadd.f32 %v673, %v677
  %v692 = vadd.f32 %v674, %v678
  %v693 = vadd.f32 %v675, %v677
  %v694 = vadd.f32 %v676, %v678
  %v695 = vmax.f32 %v679, %v680
  %v696 = vrot.slane %v695, 4
  %v697 = vmax.f32 %v695, %v696
  %v698 = vrot.slane %v697, 2
  %v699 = vmax.f32 %v697, %v698
  %v700 = vrot.slane %v699, 1
  %v701 = vmax.f32 %v699, %v700
  %v702 = vmax.f32 %v681, %v682
  %v703 = vrot.slane %v702, 4
  %v704 = vmax.f32 %v702, %v703
  %v705 = vrot.slane %v704, 2
  %v706 = vmax.f32 %v704, %v705
  %v707 = vrot.slane %v706, 1
  %v708 = vmax.f32 %v706, %v707
  %v709 = vmax.f32 %v683, %v684
  %v710 = vrot.slane %v709, 4
  %v711 = vmax.f32 %v709, %v710
  %v712 = vrot.slane %v711, 2
  %v713 = vmax.f32 %v711, %v712
  %v714 = vrot.slane %v713, 1
  %v715 = vmax.f32 %v713, %v714
  %v716 = vmax.f32 %v685, %v686
  %v717 = vrot.slane %v716, 4
  %v718 = vmax.f32 %v716, %v717
  %v719 = vrot.slane %v718, 2
  %v720 = vmax.f32 %v718, %v719
  %v721 = vrot.slane %v720, 1
  %v722 = vmax.f32 %v720, %v721
  %v723 = vmax.f32 %v687, %v688
  %v724 = vrot.slane %v723, 4
  %v725 = vmax.f32 %v723, %v724
  %v726 = vrot.slane %v725, 2
  %v727 = vmax.f32 %v725, %v726
  %v728 = vrot.slane %v727, 1
  %v729 = vmax.f32 %v727, %v728
  %v730 = vmax.f32 %v689, %v690
  %v731 = vrot.slane %v730, 4
  %v732 = vmax.f32 %v730, %v731
  %v733 = vrot.slane %v732, 2
  %v734 = vmax.f32 %v732, %v733
  %v735 = vrot.slane %v734, 1
  %v736 = vmax.f32 %v734, %v735
  %v737 = vmax.f32 %v691, %v692
  %v738 = vrot.slane %v737, 4
  %v739 = vmax.f32 %v737, %v738
  %v740 = vrot.slane %v739, 2
  %v741 = vmax.f32 %v739, %v740
  %v742 = vrot.slane %v741, 1
  %v743 = vmax.f32 %v741, %v742
  %v744 = vmax.f32 %v693, %v694
  %v745 = vrot.slane %v744, 4
  %v746 = vmax.f32 %v744, %v745
  %v747 = vrot.slane %v746, 2
  %v748 = vmax.f32 %v746, %v747
  %v749 = vrot.slane %v748, 1
  %v750 = vmax.f32 %v748, %v749
  %v751 = vpack.c.bf16 %v701, %v701
  %v752 = vpack.c.bf16 %v708, %v708
  %v753 = vpack.c.bf16 %v715, %v715
  %v754 = vpack.c.bf16 %v722, %v722
  %v755 = vpack.c.bf16 %v729, %v729
  %v756 = vpack.c.bf16 %v736, %v736
  %v757 = vpack.c.bf16 %v743, %v743
  %v758 = vpack.c.bf16 %v750, %v750
  %v759 = vld [vmem:[%s4] sm:$0xf]
  %v760 = vld [vmem:[%s4 + $0x4] sm:$0xf]
  %v761 = vld [vmem:[%s4 + $0x8] sm:$0xf]
  %v762 = vld [vmem:[%s4 + $0xc] sm:$0xf]
  %v763 = vld [vmem:[%s4 + $0x10] sm:$0xf]
  %v764 = vld [vmem:[%s4 + $0x14] sm:$0xf]
  %v765 = vld [vmem:[%s4 + $0x18] sm:$0xf]
  %v766 = vld [vmem:[%s4 + $0x1c] sm:$0xf]
  %v767 = vld [vmem:[%s4 + $0x20] sm:$0xf]
  %v768 = vld [vmem:[%s4 + $0x24] sm:$0xf]
  %v769 = vld [vmem:[%s4 + $0x28] sm:$0xf]
  %v770 = vld [vmem:[%s4 + $0x2c] sm:$0xf]
  %v771 = vld [vmem:[%s4 + $0x30] sm:$0xf]
  %v772 = vld [vmem:[%s4 + $0x34] sm:$0xf]
  %v773 = vld [vmem:[%s4 + $0x38] sm:$0xf]
  %v774 = vld [vmem:[%s4 + $0x3c] sm:$0xf]
  %v775 = vld [vmem:[%s5] sm:$0x1]
  %v777 = vperm.slane %v775, 0
  %v787 = vunpack.c.l.b16 %v751
  %v788 = vunpack.c.l.b16 %v752
  %v789 = vunpack.c.l.b16 %v753
  %v790 = vunpack.c.l.b16 %v754
  %v791 = vunpack.c.l.b16 %v755
  %v792 = vunpack.c.l.b16 %v756
  %v793 = vunpack.c.l.b16 %v757
  %v794 = vunpack.c.l.b16 %v758
  %vm795 = vcmask 1041409
  %v796 = vsel %vm795, %v788, %v787
  %vm797 = vcmask 1042434
  %v798 = vsel %vm797, %v789, %v796
  %vm799 = vcmask 1043459
  %v800 = vsel %vm799, %v790, %v798
  %vm801 = vcmask 1044484
  %v802 = vsel %vm801, %v791, %v800
  %vm803 = vcmask 1045509
  %v804 = vsel %vm803, %v792, %v802
  %vm805 = vcmask 1046534
  %v806 = vsel %vm805, %v793, %v804
  %vm807 = vcmask 1047559
  %v808 = vsel %vm807, %v794, %v806
  %v809 = vpack.c.b16 %v808, %v808
  %v827 = vunpack.c.l.b16 %v759
  %v828 = vunpack.c.l.b16 %v760
  %v829 = vunpack.c.l.b16 %v761
  %v830 = vunpack.c.l.b16 %v762
  %v831 = vunpack.c.l.b16 %v763
  %v832 = vunpack.c.l.b16 %v764
  %v833 = vunpack.c.l.b16 %v765
  %v834 = vunpack.c.l.b16 %v766
  %v835 = vunpack.c.l.b16 %v767
  %v836 = vunpack.c.l.b16 %v768
  %v837 = vunpack.c.l.b16 %v769
  %v838 = vunpack.c.l.b16 %v770
  %v839 = vunpack.c.l.b16 %v771
  %v840 = vunpack.c.l.b16 %v772
  %v841 = vunpack.c.l.b16 %v773
  %v842 = vunpack.c.l.b16 %v774
  %v843 = vpack.c.b16 %v828, %v827
  %v844 = vpack.c.b16 %v830, %v829
  %v845 = vpack.c.b16 %v832, %v831
  %v846 = vpack.c.b16 %v834, %v833
  %v847 = vpack.c.b16 %v836, %v835
  %v848 = vpack.c.b16 %v838, %v837
  %v849 = vpack.c.b16 %v840, %v839
  %v850 = vpack.c.b16 %v842, %v841
  %859 = vmatpush.bf16.msra.mxu0 %v850
  %860 = vmatpush.bf16.msra.mxu0 %v849
  %861 = vmatpush.bf16.msra.mxu0 %v848
  %862 = vmatpush.bf16.msra.mxu0 %v847
  %863 = vmatpush.bf16.msra.mxu0 %v846
  %864 = vmatpush.bf16.msra.mxu0 %v845
  %865 = vmatpush.bf16.msra.mxu0 %v844
  %866 = vmatpush.bf16.msra.mxu0 %v843
  %867 = vmatmul.bf16.gmra.mxu0 %v809
  %v868 = vpop.f32.mrf.mxu0
  %v869 = vadd.f32 %v777, %v868
  %v870 = vpop.f32.mrf.mxu0
  %871 = vdwg.mxu0
  %872 = vst [vmem:[%s6] sm:$0xff] %v869
  // Predicated region
  $region26: #{forward.1} parent=0 // pred_check
    _
  $region27: #{forward.1} parent=0 // pred_check_branch
    %874 = sbr.rel (0) target = $region29
  $region28: #{forward.1} parent=0 // pred_region
    _
  $region29: #{forward.1} parent=0 // pred_fallthru
    _
  // Predicated region
  $region30: #{forward.1} parent=0 // pred_check
    _
  $region31: #{forward.1} parent=0 // pred_check_branch
    %876 = sbr.rel (0) target = $region33
  $region32: #{forward.1} parent=0 // pred_region
    _
  $region33: #{forward.1} parent=0 // pred_fallthru
    _

</llo_original>
